<compile_context>
chip_gen: v6e
topology: v6e:2x2x1
jax: 0.10.0
libtpu: 0.0.40
codegen_flags: <defaults>
</compile_context>

<pallas_src>
import functools
import math

import jax
import jax.numpy as jnp
from jax import lax
from jax.experimental import pallas as pl
from jax.experimental.pallas import tpu as pltpu


def _round_up(x, m):
    return ((x + m - 1) // m) * m


def _vmem_capacity_bytes():
    try:
        return int(pltpu.get_tpu_info().vmem_capacity_bytes)
    except Exception:
        return 64 * 1024 * 1024  # conservative fallback (v7x per-TC VMEM)


def _attention3_kernel(qf_ref, kf_ref, vf_ref, outf_ref, alphaf_ref, *,
                       fold, d, dv, inv_sqrt_d):
    """One batch tile in the lane-dense folded layout.

    `fold` consecutive batch rows are packed along the lane axis:
      qf_ref, kf_ref  : (tbr, fold*d)
      vf_ref, outf_ref: (tbr, fold*dv)   (fold*dv is a multiple of 128)
      alphaf_ref      : (tbr, fold)
    """
    prod = qf_ref[...] * kf_ref[...]           # native dtype, no f32 upcast
    v = vf_ref[...]
    tbr = v.shape[0]
    sdtype = prod.dtype

    lane_small = lax.broadcasted_iota(jnp.int32, (tbr, fold), 1)
    lane_big = lax.broadcasted_iota(jnp.int32, (tbr, fold * dv), 1)

    a_small = jnp.ones((tbr, fold), dtype=sdtype)
    a_big = jnp.ones((tbr, fold * dv), dtype=sdtype)

    for j in range(fold):                      # fold is a small static constant
        # Row-wise scaled dot product for the j-th packed row of each folded row.
        s_j = jnp.sum(prod[:, j * d:(j + 1) * d], axis=-1, keepdims=True) * inv_sqrt_d
        # softmax over a singleton axis in closed form: 1.0 for finite scores,
        # NaN otherwise — no exp, no max, no divide.
        a_j = (s_j - s_j) + 1.0                # (tbr, 1)
        a_small = jnp.where(lane_small == j, a_j, a_small)
        sel = (lane_big >= j * dv) & (lane_big < (j + 1) * dv)
        a_big = jnp.where(sel, a_j, a_big)

    alphaf_ref[...] = a_small.astype(alphaf_ref.dtype)
    # out = alpha * value, multiplied in value's native dtype (no f32 upcast of v).
    outf_ref[...] = (a_big.astype(v.dtype) * v).astype(outf_ref.dtype)


def attention3(query, key, value, dropout=None, *, block_rows=1024,
               assume_finite=False):
    """JAX/Pallas equivalent of attention3.forward.

    query, key: (B, D); value: (B, Dv).  Returns (out, alpha) with
    out: (B, Dv), alpha: (B, 1).
    """
    if dropout is not None:
        # TODO(synk): dropout module argument not implemented (reference passes None).
        raise NotImplementedError("dropout is not supported")

    B, D = query.shape
    Dv = value.shape[-1]
    alpha_dtype = jnp.result_type(query.dtype, key.dtype)
    out_dtype = jnp.result_type(alpha_dtype, value.dtype)

    if assume_finite:
        # alpha == 1 and out == value exactly for finite scores: no pallas_call,
        # (near) zero HBM traffic — the review's preferred fast path.
        return value.astype(out_dtype), jnp.ones((B, 1), dtype=alpha_dtype)

    # --- lane-dense folding: pack `fold` batch rows along lanes so the streamed
    # value/out blocks get a last dim that is a multiple of 128 -----------------
    fold = 128 // math.gcd(Dv, 128)
    if fold > 16:                 # awkward Dv; fall back to the plain layout
        fold = 1

    # --- batch-tile sizing against the per-generation VMEM capacity ------------
    row_bytes = (D * (jnp.dtype(query.dtype).itemsize + jnp.dtype(key.dtype).itemsize)
                 + Dv * (jnp.dtype(value.dtype).itemsize + jnp.dtype(out_dtype).itemsize))
    vmem_cap = _vmem_capacity_bytes()
    # double-buffered working-set budget: ~45% of VMEM (v5e/v6e ~56 MiB of 128,
    # v7x ~28 MiB of its 64 MiB/TC), never below 24 MiB.
    budget = max(24 << 20, min(56 << 20, int(vmem_cap * 0.45)))

    row_quant = 8 * fold
    tb = max(_round_up(block_rows, row_quant), row_quant)
    while tb > row_quant and 2 * tb * row_bytes > budget:
        tb //= 2
    tb = max(row_quant, (tb // row_quant) * row_quant)

    # Balance tiles: fix the tile count first, then the smallest aligned tile
    # covering B, so padding overhead stays below one row-quantum per tile.
    n_tiles = max(1, pl.cdiv(B, tb))
    tb = _round_up(pl.cdiv(B, n_tiles), row_quant)
    b_padded = n_tiles * tb

    if b_padded != B:
        pad = b_padded - B
        query = jnp.pad(query, ((0, pad), (0, 0)))
        key = jnp.pad(key, ((0, pad), (0, 0)))
        value = jnp.pad(value, ((0, pad), (0, 0)))

    # Free (contiguous, row-major) reshapes into the lane-dense folded layout.
    bf = b_padded // fold
    tbr = tb // fold
    qf = query.reshape(bf, fold * D)
    kf = key.reshape(bf, fold * D)
    vf = value.reshape(bf, fold * Dv)

    ws = 2 * tb * row_bytes + 2 * tb * jnp.dtype(alpha_dtype).itemsize
    vmem_limit = int(min(max(ws + (16 << 20), 32 << 20), int(vmem_cap * 0.9)))

    kernel = functools.partial(_attention3_kernel, fold=fold, d=D, dv=Dv,
                               inv_sqrt_d=1.0 / math.sqrt(D))

    outf, alphaf = pl.pallas_call(
        kernel,
        out_shape=(jax.ShapeDtypeStruct((bf, fold * Dv), out_dtype),
                   jax.ShapeDtypeStruct((bf, fold), alpha_dtype)),
        grid_spec=pltpu.PrefetchScalarGridSpec(
            num_scalar_prefetch=0,
            grid=(n_tiles,),
            in_specs=[
                pl.BlockSpec((tbr, fold * D), lambda i: (i, 0)),
                pl.BlockSpec((tbr, fold * D), lambda i: (i, 0)),
                pl.BlockSpec((tbr, fold * Dv), lambda i: (i, 0)),
            ],
            out_specs=[
                pl.BlockSpec((tbr, fold * Dv), lambda i: (i, 0)),
                pl.BlockSpec((tbr, fold), lambda i: (i, 0)),
            ],
        ),
        compiler_params=pltpu.CompilerParams(
            # Independent batch tiles.  On v7x, pltpu.CORE_PARALLEL on this axis
            # would split the stream across both TensorCores.
            dimension_semantics=("parallel",),
            vmem_limit_bytes=vmem_limit,
        ),
    )(qf, kf, vf)

    out = outf.reshape(b_padded, Dv)[:B]
    alpha = alphaf.reshape(b_padded, 1)[:B]
    return out, alpha


if __name__ == "__main__":
    keys = jax.random.split(jax.random.PRNGKey(0), 6)

    def _reference(query, key, value):
        d = key.shape[-1]
        scores = jnp.sum(query * key, axis=-1, keepdims=True) / math.sqrt(d)
        alpha = jax.nn.softmax(scores, axis=-1)
        return alpha * value, alpha

    # Small shape consistent with the module's 2-D (batch, hidden) inputs.
    B, D = 8, 32
    q = jax.random.normal(keys[0], (B, D), dtype=jnp.float32)
    k = jax.random.normal(keys[1], (B, D), dtype=jnp.float32)
    v = jax.random.normal(keys[2], (B, D), dtype=jnp.float32)

    out, alpha = attention3(q, k, v)
    out = jax.block_until_ready(out)
    alpha = jax.block_until_ready(alpha)
    ref_out, ref_alpha = _reference(q, k, v)
    assert out.shape == (B, D) and alpha.shape == (B, 1)
    assert jnp.allclose(out, ref_out, atol=1e-6, rtol=1e-6)
    assert jnp.allclose(alpha, ref_alpha, atol=1e-6, rtol=1e-6)

    # Finite-input fast path (no pallas_call, zero extra HBM traffic).
    out_f, alpha_f = attention3(q, k, v, assume_finite=True)
    assert jnp.allclose(jax.block_until_ready(out_f), ref_out, atol=1e-6, rtol=1e-6)
    assert jnp.allclose(alpha_f, ref_alpha, atol=1e-6, rtol=1e-6)

    # Larger, non-divisible batch to exercise the tiled / padded / folded path.
    B2, D2 = 1030, 64
    q2 = jax.random.normal(keys[3], (B2, D2), dtype=jnp.float32)
    k2 = jax.random.normal(keys[4], (B2, D2), dtype=jnp.float32)
    v2 = jax.random.normal(keys[5], (B2, D2), dtype=jnp.float32)

    out2, alpha2 = attention3(q2, k2, v2)
    out2 = jax.block_until_ready(out2)
    ref_out2, ref_alpha2 = _reference(q2, k2, v2)
    assert out2.shape == (B2, D2) and alpha2.shape == (B2, 1)
    assert jnp.allclose(out2, ref_out2, atol=1e-6, rtol=1e-6)
    assert jnp.allclose(alpha2, ref_alpha2, atol=1e-6, rtol=1e-6)

    print("KERNEL_OK")
</pallas_src>

<mosaic_0001>
module attributes {stable_mosaic.version = 11 : i64} {
  func.func @_attention3_kernel(%arg0: i32, %arg1: memref<8x128xf32, #tpu.memory_space<vmem>>, %arg2: memref<8x128xf32, #tpu.memory_space<vmem>>, %arg3: memref<8x128xf32, #tpu.memory_space<vmem>>, %arg4: memref<8x128xf32, #tpu.memory_space<vmem>>, %arg5: memref<8x4xf32, #tpu.memory_space<vmem>>) attributes {dimension_semantics = [#tpu.dimension_semantics<parallel>], iteration_bounds = array<i64: 1>, scalar_prefetch = 0 : i64, scratch_operands = 0 : i64, tpu.core_type = #tpu.core_type<tc>, window_params = [{transform_indices = @transform_0, window_bounds = array<i64: 8, 128>}, {transform_indices = @transform_1, window_bounds = array<i64: 8, 128>}, {transform_indices = @transform_2, window_bounds = array<i64: 8, 128>}, {transform_indices = @transform_3, window_bounds = array<i64: 8, 128>}, {transform_indices = @transform_4, window_bounds = array<i64: 8, 4>}]} {
    %c0 = arith.constant 0 : index
    %c0_0 = arith.constant 0 : index
    %0 = vector.load %arg1[%c0, %c0_0] : memref<8x128xf32, #tpu.memory_space<vmem>>, vector<8x128xf32>
    %c0_1 = arith.constant 0 : index
    %c0_2 = arith.constant 0 : index
    %1 = vector.load %arg2[%c0_1, %c0_2] : memref<8x128xf32, #tpu.memory_space<vmem>>, vector<8x128xf32>
    %2 = arith.mulf %0, %1 : vector<8x128xf32>
    %c0_3 = arith.constant 0 : index
    %c0_4 = arith.constant 0 : index
    %3 = vector.load %arg3[%c0_3, %c0_4] : memref<8x128xf32, #tpu.memory_space<vmem>>, vector<8x128xf32>
    %4 = tpu.iota {dimensions = array<i32: 1>} : vector<8x4xi32>
    %5 = tpu.iota {dimensions = array<i32: 1>} : vector<8x128xi32>
    %cst = arith.constant 1.000000e+00 : f32
    %6 = vector.broadcast %cst : f32 to vector<8x4xf32>
    %cst_5 = arith.constant 1.000000e+00 : f32
    %7 = vector.broadcast %cst_5 : f32 to vector<8x128xf32>
    %8 = vector.extract_strided_slice %2 {offsets = [0, 0], sizes = [8, 32], strides = [1, 1]} : vector<8x128xf32> to vector<8x32xf32>
    %cst_6 = arith.constant dense<0.000000e+00> : vector<8xf32>
    %9 = vector.multi_reduction <add>, %8, %cst_6 [1] : vector<8x32xf32> to vector<8xf32>
    %10 = vector.shape_cast %9 : vector<8xf32> to vector<8x1xf32>
    %cst_7 = arith.constant 0.176776692 : f32
    %11 = vector.broadcast %cst_7 : f32 to vector<8x1xf32>
    %12 = arith.mulf %10, %11 : vector<8x1xf32>
    %13 = arith.subf %12, %12 : vector<8x1xf32>
    %cst_8 = arith.constant 1.000000e+00 : f32
    %14 = vector.broadcast %cst_8 : f32 to vector<8x1xf32>
    %15 = arith.addf %13, %14 : vector<8x1xf32>
    %c0_i32 = arith.constant 0 : i32
    %16 = vector.broadcast %c0_i32 : i32 to vector<8x4xi32>
    %17 = arith.cmpi eq, %4, %16 : vector<8x4xi32>
    %18 = vector.shape_cast %15 : vector<8x1xf32> to vector<8x1xf32>
    %19 = vector.broadcast %18 : vector<8x1xf32> to vector<8x4xf32>
    %20 = arith.select %17, %19, %6 : vector<8x4xi1>, vector<8x4xf32>
    %c0_i32_9 = arith.constant 0 : i32
    %21 = vector.broadcast %c0_i32_9 : i32 to vector<8x128xi32>
    %22 = arith.cmpi sge, %5, %21 : vector<8x128xi32>
    %c32_i32 = arith.constant 32 : i32
    %23 = vector.broadcast %c32_i32 : i32 to vector<8x128xi32>
    %24 = arith.cmpi slt, %5, %23 : vector<8x128xi32>
    %25 = arith.andi %22, %24 : vector<8x128xi1>
    %26 = vector.shape_cast %15 : vector<8x1xf32> to vector<8x1xf32>
    %27 = vector.broadcast %26 : vector<8x1xf32> to vector<8x128xf32>
    %28 = arith.select %25, %27, %7 : vector<8x128xi1>, vector<8x128xf32>
    %29 = vector.extract_strided_slice %2 {offsets = [0, 32], sizes = [8, 32], strides = [1, 1]} : vector<8x128xf32> to vector<8x32xf32>
    %cst_10 = arith.constant dense<0.000000e+00> : vector<8xf32>
    %30 = vector.multi_reduction <add>, %29, %cst_10 [1] : vector<8x32xf32> to vector<8xf32>
    %31 = vector.shape_cast %30 : vector<8xf32> to vector<8x1xf32>
    %cst_11 = arith.constant 0.176776692 : f32
    %32 = vector.broadcast %cst_11 : f32 to vector<8x1xf32>
    %33 = arith.mulf %31, %32 : vector<8x1xf32>
    %34 = arith.subf %33, %33 : vector<8x1xf32>
    %cst_12 = arith.constant 1.000000e+00 : f32
    %35 = vector.broadcast %cst_12 : f32 to vector<8x1xf32>
    %36 = arith.addf %34, %35 : vector<8x1xf32>
    %c1_i32 = arith.constant 1 : i32
    %37 = vector.broadcast %c1_i32 : i32 to vector<8x4xi32>
    %38 = arith.cmpi eq, %4, %37 : vector<8x4xi32>
    %39 = vector.shape_cast %36 : vector<8x1xf32> to vector<8x1xf32>
    %40 = vector.broadcast %39 : vector<8x1xf32> to vector<8x4xf32>
    %41 = arith.select %38, %40, %20 : vector<8x4xi1>, vector<8x4xf32>
    %c32_i32_13 = arith.constant 32 : i32
    %42 = vector.broadcast %c32_i32_13 : i32 to vector<8x128xi32>
    %43 = arith.cmpi sge, %5, %42 : vector<8x128xi32>
    %c64_i32 = arith.constant 64 : i32
    %44 = vector.broadcast %c64_i32 : i32 to vector<8x128xi32>
    %45 = arith.cmpi slt, %5, %44 : vector<8x128xi32>
    %46 = arith.andi %43, %45 : vector<8x128xi1>
    %47 = vector.shape_cast %36 : vector<8x1xf32> to vector<8x1xf32>
    %48 = vector.broadcast %47 : vector<8x1xf32> to vector<8x128xf32>
    %49 = arith.select %46, %48, %28 : vector<8x128xi1>, vector<8x128xf32>
    %50 = vector.extract_strided_slice %2 {offsets = [0, 64], sizes = [8, 32], strides = [1, 1]} : vector<8x128xf32> to vector<8x32xf32>
    %cst_14 = arith.constant dense<0.000000e+00> : vector<8xf32>
    %51 = vector.multi_reduction <add>, %50, %cst_14 [1] : vector<8x32xf32> to vector<8xf32>
    %52 = vector.shape_cast %51 : vector<8xf32> to vector<8x1xf32>
    %cst_15 = arith.constant 0.176776692 : f32
    %53 = vector.broadcast %cst_15 : f32 to vector<8x1xf32>
    %54 = arith.mulf %52, %53 : vector<8x1xf32>
    %55 = arith.subf %54, %54 : vector<8x1xf32>
    %cst_16 = arith.constant 1.000000e+00 : f32
    %56 = vector.broadcast %cst_16 : f32 to vector<8x1xf32>
    %57 = arith.addf %55, %56 : vector<8x1xf32>
    %c2_i32 = arith.constant 2 : i32
    %58 = vector.broadcast %c2_i32 : i32 to vector<8x4xi32>
    %59 = arith.cmpi eq, %4, %58 : vector<8x4xi32>
    %60 = vector.shape_cast %57 : vector<8x1xf32> to vector<8x1xf32>
    %61 = vector.broadcast %60 : vector<8x1xf32> to vector<8x4xf32>
    %62 = arith.select %59, %61, %41 : vector<8x4xi1>, vector<8x4xf32>
    %c64_i32_17 = arith.constant 64 : i32
    %63 = vector.broadcast %c64_i32_17 : i32 to vector<8x128xi32>
    %64 = arith.cmpi sge, %5, %63 : vector<8x128xi32>
    %c96_i32 = arith.constant 96 : i32
    %65 = vector.broadcast %c96_i32 : i32 to vector<8x128xi32>
    %66 = arith.cmpi slt, %5, %65 : vector<8x128xi32>
    %67 = arith.andi %64, %66 : vector<8x128xi1>
    %68 = vector.shape_cast %57 : vector<8x1xf32> to vector<8x1xf32>
    %69 = vector.broadcast %68 : vector<8x1xf32> to vector<8x128xf32>
    %70 = arith.select %67, %69, %49 : vector<8x128xi1>, vector<8x128xf32>
    %71 = vector.extract_strided_slice %2 {offsets = [0, 96], sizes = [8, 32], strides = [1, 1]} : vector<8x128xf32> to vector<8x32xf32>
    %cst_18 = arith.constant dense<0.000000e+00> : vector<8xf32>
    %72 = vector.multi_reduction <add>, %71, %cst_18 [1] : vector<8x32xf32> to vector<8xf32>
    %73 = vector.shape_cast %72 : vector<8xf32> to vector<8x1xf32>
    %cst_19 = arith.constant 0.176776692 : f32
    %74 = vector.broadcast %cst_19 : f32 to vector<8x1xf32>
    %75 = arith.mulf %73, %74 : vector<8x1xf32>
    %76 = arith.subf %75, %75 : vector<8x1xf32>
    %cst_20 = arith.constant 1.000000e+00 : f32
    %77 = vector.broadcast %cst_20 : f32 to vector<8x1xf32>
    %78 = arith.addf %76, %77 : vector<8x1xf32>
    %c3_i32 = arith.constant 3 : i32
    %79 = vector.broadcast %c3_i32 : i32 to vector<8x4xi32>
    %80 = arith.cmpi eq, %4, %79 : vector<8x4xi32>
    %81 = vector.shape_cast %78 : vector<8x1xf32> to vector<8x1xf32>
    %82 = vector.broadcast %81 : vector<8x1xf32> to vector<8x4xf32>
    %83 = arith.select %80, %82, %62 : vector<8x4xi1>, vector<8x4xf32>
    %c96_i32_21 = arith.constant 96 : i32
    %84 = vector.broadcast %c96_i32_21 : i32 to vector<8x128xi32>
    %85 = arith.cmpi sge, %5, %84 : vector<8x128xi32>
    %c128_i32 = arith.constant 128 : i32
    %86 = vector.broadcast %c128_i32 : i32 to vector<8x128xi32>
    %87 = arith.cmpi slt, %5, %86 : vector<8x128xi32>
    %88 = arith.andi %85, %87 : vector<8x128xi1>
    %89 = vector.shape_cast %78 : vector<8x1xf32> to vector<8x1xf32>
    %90 = vector.broadcast %89 : vector<8x1xf32> to vector<8x128xf32>
    %91 = arith.select %88, %90, %70 : vector<8x128xi1>, vector<8x128xf32>
    %c0_22 = arith.constant 0 : index
    %c0_23 = arith.constant 0 : index
    %92 = vector.load %arg5[%c0_22, %c0_23] : memref<8x4xf32, #tpu.memory_space<vmem>>, vector<8x4xf32>
    tpu.vector_store %arg5[%c0_22, %c0_23], %83 {strides = array<i32>} : memref<8x4xf32, #tpu.memory_space<vmem>>, vector<8x4xf32>,
    %93 = arith.mulf %91, %3 : vector<8x128xf32>
    %c0_24 = arith.constant 0 : index
    %c0_25 = arith.constant 0 : index
    %94 = vector.load %arg4[%c0_24, %c0_25] : memref<8x128xf32, #tpu.memory_space<vmem>>, vector<8x128xf32>
    tpu.vector_store %arg4[%c0_24, %c0_25], %93 {strides = array<i32>} : memref<8x128xf32, #tpu.memory_space<vmem>>, vector<8x128xf32>,
    return
  }
  func.func @transform_0(%arg0: i32) -> (i32, i32) {
    %c0_i32 = arith.constant 0 : i32
    %c0_i32_0 = arith.constant 0 : i32
    return %arg0, %c0_i32 : i32, i32
  }
  func.func @transform_1(%arg0: i32) -> (i32, i32) {
    %c0_i32 = arith.constant 0 : i32
    %c0_i32_0 = arith.constant 0 : i32
    return %arg0, %c0_i32 : i32, i32
  }
  func.func @transform_2(%arg0: i32) -> (i32, i32) {
    %c0_i32 = arith.constant 0 : i32
    %c0_i32_0 = arith.constant 0 : i32
    return %arg0, %c0_i32 : i32, i32
  }
  func.func @transform_3(%arg0: i32) -> (i32, i32) {
    %c0_i32 = arith.constant 0 : i32
    %c0_i32_0 = arith.constant 0 : i32
    return %arg0, %c0_i32 : i32, i32
  }
  func.func @transform_4(%arg0: i32) -> (i32, i32) {
    %c0_i32 = arith.constant 0 : i32
    %c0_i32_0 = arith.constant 0 : i32
    return %arg0, %c0_i32 : i32, i32
  }
}

</mosaic_0001>

<llo_original>
// kernel: tpu_custom_call.1
$region0: #{tpu_custom_call.1}
  #allocation0 [shape = 'u32[]', space=smem, size = 0x4, offset = 0x4, fixed_abs, tag = 'smem constant byte address 0x4 - core index']
  #allocation1 [shape = 'u32[144,128]{1,0:T(1,128)}', space=vmem, size = 0x12000, scoped, tag = 'internal scratch']
  %s0 = inlined_call_operand.hbm [shape: f32[8,128], index: 0, kind: input, shape index: {}]
  %s1 = inlined_call_operand.hbm [shape: f32[8,128], index: 1, kind: input, shape index: {}]
  %s2 = inlined_call_operand.hbm [shape: f32[8,128], index: 2, kind: input, shape index: {}]
  %s3 = inlined_call_operand.hbm [shape: f32[8,128], index: 3, kind: output, shape index: {0}]
  %s4 = inlined_call_operand.vmem [shape: f32[8,4], index: 4, kind: output, shape index: {1}]
  %5 = xla_tuple %s3, %s4
  %s6 = sld [smem:[#allocation0]]
  $region42: #{tpu_custom_call.1} parent=0
    _
  %s8 = ssub.s32 1, %s6
  %s9 = scalar_select 0, %s8, %s6
  $region1: #{tpu_custom_call.1} parent=0
    #allocation2 [shape = 'u8[4096]{0}', space=vmem, size = 0x1000, scoped, tag = 'input window, operand 0, single buffered']
    #allocation3 [shape = 's32[1]{0}', space=sflag, size = 0x4, scoped, tag = 'scoped memory for tpu_custom_call.1']
    #allocation4 [shape = 's32[1]{0}', space=sflag, size = 0x4, scoped, tag = 'scoped memory for tpu_custom_call.1']
    #allocation5 [shape = 'u8[4096]{0}', space=vmem, size = 0x1000, scoped, tag = 'input window, operand 1, single buffered']
    #allocation6 [shape = 's32[1]{0}', space=sflag, size = 0x4, scoped, tag = 'scoped memory for tpu_custom_call.1']
    #allocation7 [shape = 'u8[4096]{0}', space=vmem, size = 0x1000, scoped, tag = 'input window, operand 2, single buffered']
    #allocation8 [shape = 'u8[4096]{0}', space=vmem, size = 0x1000, scoped, tag = 'output window, operand 0, single buffered']
    %10 = vsyncpa [#allocation3], 0
    %11 = vsyncpa [#allocation6], 0
    %12 = vsyncpa [#allocation4], 0
    // Predicated region
    $region2: #{tpu_custom_call.1} parent=1 // pred_check
      _
    $region3: #{tpu_custom_call.1} parent=1 // pred_check_branch
      %14 = sbr.rel (0) target = $region5
    $region4: #{tpu_custom_call.1} parent=1 // pred_region
      %s16 = ssub.s32 128, 128
      %17 = vsyncadd [#allocation3], %s16
      %s19 = sshll.u32 [#allocation2], 4
      %s20 = int_to_ptr.vmem [resolvable:$true] %s19
      %22 = dma.hbm_to_vmem [thread:$0]  %s0, 128, %s20, [#allocation3]
    $region5: #{tpu_custom_call.1} parent=1 // pred_fallthru
      _
    // Predicated region
    $region6: #{tpu_custom_call.1} parent=1 // pred_check
      _
    $region7: #{tpu_custom_call.1} parent=1 // pred_check_branch
      %24 = sbr.rel (0) target = $region9
    $region8: #{tpu_custom_call.1} parent=1 // pred_region
      %s26 = ssub.s32 128, 128
      %27 = vsyncadd [#allocation6], %s26
      %s29 = sshll.u32 [#allocation5], 4
      %s30 = int_to_ptr.vmem [resolvable:$true] %s29
      %32 = dma.hbm_to_vmem [thread:$0]  %s1, 128, %s30, [#allocation6]
    $region9: #{tpu_custom_call.1} parent=1 // pred_fallthru
      _
    // Predicated region
    $region10: #{tpu_custom_call.1} parent=1 // pred_check
      _
    $region11: #{tpu_custom_call.1} parent=1 // pred_check_branch
      %34 = sbr.rel (0) target = $region13
    $region12: #{tpu_custom_call.1} parent=1 // pred_region
      %s36 = ssub.s32 128, 128
      %37 = vsyncadd [#allocation6], %s36
      %s39 = sshll.u32 [#allocation7], 4
      %s40 = int_to_ptr.vmem [resolvable:$true] %s39
      %42 = dma.hbm_to_vmem [thread:$0]  %s2, 128, %s40, [#allocation6]
    $region13: #{tpu_custom_call.1} parent=1 // pred_fallthru
      _
    // Predicated region
    $region14: #{tpu_custom_call.1} parent=1 // pred_check
      _
    $region15: #{tpu_custom_call.1} parent=1 // pred_check_branch
      %44 = sbr.rel (0) target = $region17
    $region16: #{tpu_custom_call.1} parent=1 // pred_region
      %45 = dma.done [#allocation3], 128
    $region17: #{tpu_custom_call.1} parent=1 // pred_fallthru
      _
    // Predicated region
    $region18: #{tpu_custom_call.1} parent=1 // pred_check
      _
    $region19: #{tpu_custom_call.1} parent=1 // pred_check_branch
      %47 = sbr.rel (0) target = $region21
    $region20: #{tpu_custom_call.1} parent=1 // pred_region
      %48 = dma.done [#allocation6], 128
    $region21: #{tpu_custom_call.1} parent=1 // pred_fallthru
      _
    // Predicated region
    $region22: #{tpu_custom_call.1} parent=1 // pred_check
      _
    $region23: #{tpu_custom_call.1} parent=1 // pred_check_branch
      %50 = sbr.rel (0) target = $region25
    $region24: #{tpu_custom_call.1} parent=1 // pred_region
      %51 = dma.done [#allocation6], 128
    $region25: #{tpu_custom_call.1} parent=1 // pred_fallthru
      _
    %v52 = vld [vmem:[#allocation2] sm:$0xff]
    %v53 = vld [vmem:[#allocation5] sm:$0xff]
    %v54 = vmul.f32 %v52, %v53
    %v55 = vld [vmem:[#allocation7] sm:$0xff]
    %v56 = vlaneseq
    %v57 = vand.u32 %v56, 127
    %vm58 = vcmask 261120
    %v59 = vsel %vm58, %v54, 0.0
    %60 = vadd.xlane.f32.xlu0 %v59
    %v61 = vpop.xlane.xlu0 %60
    %v62 = vmul.f32 %v61, 0.17677669
    %v63 = vsub.f32 %v62, %v62
    %v64 = vadd.f32 %v63, 1.0
    %vm65 = vcmp.eq.s32.totalorder %v57, 0
    %v66 = vsel %vm65, %v64, 1.0
    %vm67 = vcmp.ge.s32.totalorder %v57, 0
    %vm68 = vcmp.lt.s32.totalorder %v57, 32
    %vm69 = vmand %vm67, %vm68
    %v70 = vsel %vm69, %v64, 1.0
    %72 = vrot.lane.b32.xlu0 %v54, 96
    %v73 = vpop.permute.xlu0 %72
    %v75 = vsel %vm58, %v73, 0.0
    %76 = vadd.xlane.f32.xlu0 %v75
    %v77 = vpop.xlane.xlu0 %76
    %v78 = vmul.f32 %v77, 0.17677669
    %v79 = vsub.f32 %v78, %v78
    %v80 = vadd.f32 %v79, 1.0
    %vm81 = vcmp.eq.s32.totalorder %v57, 1
    %v82 = vsel %vm81, %v80, %v66
    %vm83 = vcmp.ge.s32.totalorder %v57, 32
    %vm84 = vcmp.lt.s32.totalorder %v57, 64
    %vm85 = vmand %vm83, %vm84
    %v86 = vsel %vm85, %v80, %v70
    %87 = vrot.lane.b32.xlu0 %v54, 64
    %v88 = vpop.permute.xlu0 %87
    %v90 = vsel %vm58, %v88, 0.0
    %91 = vadd.xlane.f32.xlu0 %v90
    %v92 = vpop.xlane.xlu0 %91
    %v93 = vmul.f32 %v92, 0.17677669
    %v94 = vsub.f32 %v93, %v93
    %v95 = vadd.f32 %v94, 1.0
    %vm96 = vcmp.eq.s32.totalorder %v57, 2
    %v97 = vsel %vm96, %v95, %v82
    %vm98 = vcmp.ge.s32.totalorder %v57, 64
    %vm99 = vcmp.lt.s32.totalorder %v57, 96
    %vm100 = vmand %vm98, %vm99
    %v101 = vsel %vm100, %v95, %v86
    %102 = vrot.lane.b32.xlu0 %v54, 32
    %v103 = vpop.permute.xlu0 %102
    %v105 = vsel %vm58, %v103, 0.0
    %106 = vadd.xlane.f32.xlu0 %v105
    %v107 = vpop.xlane.xlu0 %106
    %v108 = vmul.f32 %v107, 0.17677669
    %v109 = vsub.f32 %v108, %v108
    %v110 = vadd.f32 %v109, 1.0
    %vm111 = vcmp.eq.s32.totalorder %v57, 3
    %v112 = vsel %vm111, %v110, %v97
    %vm113 = vcmp.ge.s32.totalorder %v57, 96
    %vm114 = vcmp.lt.s32.totalorder %v57, 128
    %vm115 = vmand %vm113, %vm114
    %v116 = vsel %vm115, %v110, %v101
    %vm117 = vcmask 31744
    %118 = vst.msk [vmem:[%s4] sm:$0xff] %vm117, %v112
    %v119 = vmul.f32 %v116, %v55
    %120 = vst [vmem:[#allocation8] sm:$0xff] %v119
    // Predicated region
    $region26: #{tpu_custom_call.1} parent=1 // pred_check
      _
    $region27: #{tpu_custom_call.1} parent=1 // pred_check_branch
      %122 = sbr.rel (0) target = $region29
    $region28: #{tpu_custom_call.1} parent=1 // pred_region
      %s124 = ssub.s32 128, 128
      %125 = vsyncadd [#allocation4], %s124
      %s127 = sshll.u32 [#allocation8], 4
      %s128 = int_to_ptr.vmem [resolvable:$true] %s127
      %130 = dma.vmem_to_hbm [thread:$0]  %s128, 128, %s3, [#allocation4]
    $region29: #{tpu_custom_call.1} parent=1 // pred_fallthru
      _
    // Predicated region
    $region30: #{tpu_custom_call.1} parent=1 // pred_check
      _
    $region31: #{tpu_custom_call.1} parent=1 // pred_check_branch
      %132 = sbr.rel (0) target = $region33
    $region32: #{tpu_custom_call.1} parent=1 // pred_region
      _
    $region33: #{tpu_custom_call.1} parent=1 // pred_fallthru
      _
    // Predicated region
    $region34: #{tpu_custom_call.1} parent=1 // pred_check
      _
    $region35: #{tpu_custom_call.1} parent=1 // pred_check_branch
      %134 = sbr.rel (0) target = $region37
    $region36: #{tpu_custom_call.1} parent=1 // pred_region
      %135 = dma.done [#allocation4], 128
    $region37: #{tpu_custom_call.1} parent=1 // pred_fallthru
      _
    // Predicated region
    $region38: #{tpu_custom_call.1} parent=1 // pred_check
      _
    $region39: #{tpu_custom_call.1} parent=1 // pred_check_branch
      %137 = sbr.rel (0) target = $region41
    $region40: #{tpu_custom_call.1} parent=1 // pred_region
      _
    $region41: #{tpu_custom_call.1} parent=1 // pred_fallthru
      _
    %138 = vsyncpa [#allocation3], 1
    %139 = vsyncpa [#allocation6], 1
    %140 = vsyncpa [#allocation4], 1

</llo_original>
